<compile_context>
chip_gen: v6e
topology: v6e:2x2x1
jax: 0.10.0
libtpu: 0.0.40
codegen_flags: <defaults>
</compile_context>

<pallas_src>
import functools

import jax
import jax.numpy as jnp
from jax import lax
from jax.experimental import pallas as pl
from jax.experimental.pallas import tpu as pltpu

_MIB = 1024 * 1024


def _vmem_capacity_bytes() -> int:
    """Physical VMEM per TensorCore; conservative (v7x 64 MiB) fallback."""
    try:
        return int(pltpu.get_tpu_info().vmem_capacity_bytes)
    except Exception:  # no TPU info available (e.g. interpret mode)
        return 64 * _MIB


def _make_info_nce_kernel(inv_tau: float):
    """Builds the fused kernel with 1/tau baked in as a compile-time constant."""

    def kernel(q_ref, k_ref, qm_ref, km_ref,
               scores_ref, poss_ref, negs_ref, loss_ref,
               q_acc, k_acc, qm_acc, km_acc):
        s = pl.program_id(0)

        # ---- init accumulators on the first seq tile ----
        @pl.when(s == 0)
        def _init():
            q_acc[...] = jnp.zeros_like(q_acc)
            k_acc[...] = jnp.zeros_like(k_acc)
            qm_acc[...] = jnp.zeros_like(qm_acc)
            km_acc[...] = jnp.zeros_like(km_acc)

        # ---- masked-sum accumulation for this seq tile ----
        # Masks arrive as f32 (exact integer counts).  The elementwise
        # mask-multiply is done in the embedding's native dtype so bf16 inputs
        # use packed VPU lanes; only the reduction accumulates in f32.
        qm = qm_ref[...]                              # [B, TS] f32
        km = km_ref[...]                              # [2B, TS] f32
        emb_dtype = q_ref.dtype
        qm_e = qm.astype(emb_dtype)                   # exact 0/1 cast
        km_e = km.astype(emb_dtype)

        q_acc[...] += jnp.sum(q_ref[...] * qm_e[:, :, None], axis=1,
                              dtype=jnp.float32)                      # [B, H]
        k_acc[...] += jnp.sum(k_ref[...] * km_e[:, :, None], axis=1,
                              dtype=jnp.float32)                      # [2B, H]
        qm_acc[...] += jnp.sum(qm, axis=1, keepdims=True)             # [B, 1]
        km_acc[...] += jnp.sum(km, axis=1, keepdims=True)             # [2B, 1]

        # ---- epilogue: normalize -> matmul -> diag -> cross entropy ----
        @pl.when(s == pl.num_programs(0) - 1)
        def _finalize():
            # masked mean (torch: clamp(sum, min=1e-9)); reciprocal-multiply
            q_vec = q_acc[...] * pl.reciprocal(jnp.maximum(qm_acc[...], 1e-9))
            k_vec = k_acc[...] * pl.reciprocal(jnp.maximum(km_acc[...], 1e-9))

            # L2 normalize: x / max(||x||, 1e-12) == x * rsqrt(max(sumsq, 1e-24))
            q_vec = q_vec * lax.rsqrt(
                jnp.maximum(jnp.sum(q_vec * q_vec, axis=-1, keepdims=True), 1e-24))
            k_vec = k_vec * lax.rsqrt(
                jnp.maximum(jnp.sum(k_vec * k_vec, axis=-1, keepdims=True), 1e-24))

            # similarity on the MXU; contract H of both operands (no explicit .T)
            scores = lax.dot_general(
                q_vec, k_vec, (((1,), (1,)), ((), ())),
                preferred_element_type=jnp.float32)                   # [B, 2B]
            scores_ref[...] = scores

            b = scores.shape[0]
            twob = scores.shape[1]
            row = lax.broadcasted_iota(jnp.int32, (b, twob), 0)
            col = lax.broadcasted_iota(jnp.int32, (b, twob), 1)
            poss = jnp.sum(jnp.where(col == row, scores, 0.0),
                           axis=-1, keepdims=True)                    # [B, 1]
            negs = jnp.sum(jnp.where(col == row + b, scores, 0.0),
                           axis=-1, keepdims=True)                    # [B, 1]
            poss_ref[...] = poss
            negs_ref[...] = negs

            # cross entropy with targets = arange(B) on scores * (1/tau);
            # reuse the diagonal reduction: diag(scaled) = poss * inv_tau.
            scaled = scores * inv_tau
            m = jnp.max(scaled, axis=-1, keepdims=True)               # [B, 1]
            lse = m + jnp.log(jnp.sum(jnp.exp(scaled - m),
                                      axis=-1, keepdims=True))        # [B, 1]
            per_example = lse - poss * inv_tau                        # [B, 1]
            loss_ref[...] = jnp.sum(per_example, axis=0,
                                    keepdims=True) * (1.0 / b)        # [1, 1]

    return kernel


def _choose_seq_tile(seq_len: int, per_token_bytes: int,
                     fixed_bytes: int, budget_bytes: int) -> int:
    """Pick the largest seq tile that (a) divides seq_len, (b) is a multiple of
    128 when possible (lane width of the mask last dim; full-extent blocks are
    always legal), and (c) fits the VMEM budget with real accounting
    (double-buffering + multiply temporaries + fixed allocations)."""
    avail = budget_bytes - fixed_bytes
    cands = [t for t in range(128, seq_len + 1, 128) if seq_len % t == 0]
    if not cands:
        # seq_len not 128-divisible / small: divisors that are multiples of 8,
        # plus the full extent (full-dim blocks are always legal).
        cands = sorted({t for t in range(8, seq_len + 1, 8)
                        if seq_len % t == 0} | {seq_len})
    fitting = [t for t in cands if t * per_token_bytes <= avail]
    if fitting:
        return max(fitting)
    # TODO(synk): for very large B*H even the smallest seq tile exceeds the
    # budget; that needs a second grid axis over key/query row tiles
    # (accumulating into pl.ds slices of the scratch) rather than shrinking ts.
    return min(cands)


@functools.partial(jax.jit, static_argnames=("tau",))
def info_nce_loss(query_embs, key_embs, q_mask, k_mask, tau):
    """Pallas-backed equivalent of InfoNCELoss.forward (mean pooling)."""
    B, S, H = query_embs.shape
    twoB = key_embs.shape[0]
    rows = B + twoB
    inv_tau = 1.0 / float(tau)

    # Masks as f32 (exact counts, no int->float convert in-kernel); embeddings
    # stay in their native dtype (f32 or bf16) -- no upcast at the boundary.
    qm = q_mask.astype(jnp.float32)
    km = k_mask.astype(jnp.float32)

    emb_bytes = jnp.dtype(query_embs.dtype).itemsize
    mask_bytes = 4

    # ---- generation-aware VMEM plan ----
    # v5e/v6e: 128 MiB physical -> limit ~108 MiB; v7x: 64 MiB -> ~54 MiB.
    vmem_capacity = _vmem_capacity_bytes()
    vmem_limit = int(vmem_capacity * 0.85)

    # Per-seq-token VMEM: streaming tiles are double-buffered by the pipeline,
    # plus one live mask-multiply temporary per embedding tile (emb dtype).
    per_token_bytes = (2 * (rows * H * emb_bytes + rows * mask_bytes)
                       + rows * H * emb_bytes)
    # Fixed VMEM: f32 accumulators, double-buffered output blocks, and an
    # allowance for epilogue temporaries (pooled/normalized vectors, scores,
    # softmax intermediates).
    fixed_bytes = (rows * (H + 1) * 4
                   + 2 * (B * twoB + 2 * B + 1) * 4
                   + 4 * rows * H * 4
                   + 8 * B * twoB * 4)
    budget_bytes = vmem_limit - 4 * _MIB   # headroom for compiler scratch

    ts = _choose_seq_tile(S, per_token_bytes, fixed_bytes, budget_bytes)
    n_tiles = S // ts

    # Advisory cost: this call is dominated by HBM streaming of q/k/masks.
    bytes_accessed = (rows * S * H * emb_bytes + rows * S * mask_bytes
                      + (B * twoB + 2 * B + 1) * 4)
    flops = 2 * rows * S * H + 2 * B * twoB * H + 8 * B * twoB
    transcendentals = B * twoB + 2 * B + rows   # exp/log + rsqrt + reciprocal
    cost = pl.CostEstimate(flops=flops, transcendentals=transcendentals,
                           bytes_accessed=bytes_accessed)

    out_shapes = (
        jax.ShapeDtypeStruct((B, twoB), jnp.float32),   # all_scores
        jax.ShapeDtypeStruct((B, 1), jnp.float32),      # poss
        jax.ShapeDtypeStruct((B, 1), jnp.float32),      # negs
        jax.ShapeDtypeStruct((1, 1), jnp.float32),      # loss
    )

    # TODO(synk): on v7x (2 TCs/chip) add a leading size-2 "parallel" grid axis
    # (or pl.core_map) splitting the seq reduction across cores with per-core
    # partial accumulators; a single "arbitrary" axis uses one TC.
    scores, poss, negs, loss = pl.pallas_call(
        _make_info_nce_kernel(inv_tau),
        out_shape=out_shapes,
        grid=(n_tiles,),
        in_specs=[
            pl.BlockSpec((B, ts, H), lambda s: (0, s, 0)),
            pl.BlockSpec((twoB, ts, H), lambda s: (0, s, 0)),
            pl.BlockSpec((B, ts), lambda s: (0, s)),
            pl.BlockSpec((twoB, ts), lambda s: (0, s)),
        ],
        out_specs=(
            pl.BlockSpec((B, twoB), lambda s: (0, 0)),
            pl.BlockSpec((B, 1), lambda s: (0, 0)),
            pl.BlockSpec((B, 1), lambda s: (0, 0)),
            pl.BlockSpec((1, 1), lambda s: (0, 0)),
        ),
        scratch_shapes=[
            pltpu.VMEM((B, H), jnp.float32),      # pooled q accumulator
            pltpu.VMEM((twoB, H), jnp.float32),   # pooled k accumulator
            pltpu.VMEM((B, 1), jnp.float32),      # q mask-sum accumulator
            pltpu.VMEM((twoB, 1), jnp.float32),   # k mask-sum accumulator
        ],
        compiler_params=pltpu.CompilerParams(
            dimension_semantics=("arbitrary",),   # seq axis is a reduction
            vmem_limit_bytes=vmem_limit,
        ),
        cost_estimate=cost,
    )(query_embs, key_embs, qm, km)

    targets = jnp.arange(B, dtype=jnp.int32)
    return {
        "all_scores": scores,
        "targets": targets,
        "poss": poss[:, 0],
        "negs": negs[:, 0],
        "loss": loss[0, 0],
    }


def _reference(query_embs, key_embs, q_mask, k_mask, tau):
    """Pure-JAX reference mirroring the PyTorch forward, for validation."""
    qm = q_mask.astype(jnp.float32)
    km = k_mask.astype(jnp.float32)
    q_sum = jnp.maximum(qm.sum(axis=1, keepdims=True), 1e-9)
    q_vec = (query_embs * qm[:, :, None]).sum(axis=1) / q_sum
    q_vec = q_vec / jnp.maximum(jnp.linalg.norm(q_vec, axis=-1, keepdims=True), 1e-12)
    k_sum = jnp.maximum(km.sum(axis=1, keepdims=True), 1e-9)
    k_vec = (key_embs * km[:, :, None]).sum(axis=1) / k_sum
    k_vec = k_vec / jnp.maximum(jnp.linalg.norm(k_vec, axis=-1, keepdims=True), 1e-12)
    scores = q_vec @ k_vec.T
    B = scores.shape[0]
    tgt = jnp.arange(B)
    scaled = scores / tau
    logz = jax.scipy.special.logsumexp(scaled, axis=-1)
    loss = jnp.mean(logz - scaled[tgt, tgt])
    return scores, scores[tgt, tgt], scores[tgt, tgt + B], loss


if __name__ == "__main__":
    TAU = 0.07  # module registers tau as a fixed buffer from cfg.execution.tau

    key = jax.random.PRNGKey(0)
    k1, k2, k3, k4 = jax.random.split(key, 4)

    batch, seq, hidden = 2, 8, 32
    query_embs = jax.random.normal(k1, (batch, seq, hidden), jnp.float32)
    key_embs = jax.random.normal(k2, (2 * batch, seq, hidden), jnp.float32)
    q_mask = (jax.random.uniform(k3, (batch, seq)) > 0.3).astype(jnp.int32)
    k_mask = (jax.random.uniform(k4, (2 * batch, seq)) > 0.3).astype(jnp.int32)
    # guarantee at least one valid token per row
    q_mask = q_mask.at[:, 0].set(1)
    k_mask = k_mask.at[:, 0].set(1)

    out = info_nce_loss(query_embs, key_embs, q_mask, k_mask, TAU)
    jax.block_until_ready(out)

    ref_scores, ref_poss, ref_negs, ref_loss = _reference(
        query_embs, key_embs, q_mask, k_mask, TAU)
    assert jnp.allclose(out["all_scores"], ref_scores, atol=1e-5)
    assert jnp.allclose(out["poss"], ref_poss, atol=1e-5)
    assert jnp.allclose(out["negs"], ref_negs, atol=1e-5)
    assert jnp.allclose(out["loss"], ref_loss, atol=1e-5)
    assert jnp.array_equal(out["targets"], jnp.arange(batch))

    print("KERNEL_OK")
</pallas_src>

<mosaic_0001>
module attributes {stable_mosaic.version = 11 : i64} {
  func.func @kernel(%arg0: i32, %arg1: memref<2x8x32xf32, #tpu.memory_space<vmem>>, %arg2: memref<4x8x32xf32, #tpu.memory_space<vmem>>, %arg3: memref<2x8xf32, #tpu.memory_space<vmem>>, %arg4: memref<4x8xf32, #tpu.memory_space<vmem>>, %arg5: memref<2x4xf32, #tpu.memory_space<vmem>>, %arg6: memref<2x1xf32, #tpu.memory_space<vmem>>, %arg7: memref<2x1xf32, #tpu.memory_space<vmem>>, %arg8: memref<1x1xf32, #tpu.memory_space<vmem>>, %arg9: memref<2x32xf32, #tpu.memory_space<vmem>>, %arg10: memref<4x32xf32, #tpu.memory_space<vmem>>, %arg11: memref<2x1xf32, #tpu.memory_space<vmem>>, %arg12: memref<4x1xf32, #tpu.memory_space<vmem>>) attributes {dimension_semantics = [#tpu.dimension_semantics<arbitrary>], iteration_bounds = array<i64: 1>, scalar_prefetch = 0 : i64, scratch_operands = 4 : i64, tpu.core_type = #tpu.core_type<tc>, window_params = [{transform_indices = @transform_0, window_bounds = array<i64: 2, 8, 32>}, {transform_indices = @transform_1, window_bounds = array<i64: 4, 8, 32>}, {transform_indices = @transform_2, window_bounds = array<i64: 2, 8>}, {transform_indices = @transform_3, window_bounds = array<i64: 4, 8>}, {pipeline_mode = #tpu.pipeline_mode<synchronous>, transform_indices = @transform_4, window_bounds = array<i64: 2, 4>}, {pipeline_mode = #tpu.pipeline_mode<synchronous>, transform_indices = @transform_5, window_bounds = array<i64: 2, 1>}, {pipeline_mode = #tpu.pipeline_mode<synchronous>, transform_indices = @transform_6, window_bounds = array<i64: 2, 1>}, {pipeline_mode = #tpu.pipeline_mode<synchronous>, transform_indices = @transform_7, window_bounds = array<i64: 1, 1>}]} {
    %c0_i32 = arith.constant 0 : i32
    %0 = arith.cmpi eq, %arg0, %c0_i32 : i32
    %1 = arith.extui %0 : i1 to i32
    %c0_i32_0 = arith.constant 0 : i32
    %2 = arith.cmpi ne, %1, %c0_i32_0 : i32
    scf.if %2 {
      %cst_31 = arith.constant 0.000000e+00 : f32
      %34 = vector.broadcast %cst_31 : f32 to vector<2x32xf32>
      %c0_32 = arith.constant 0 : index
      %c0_33 = arith.constant 0 : index
      %35 = vector.load %arg9[%c0_32, %c0_33] : memref<2x32xf32, #tpu.memory_space<vmem>>, vector<2x32xf32>
      tpu.vector_store %arg9[%c0_32, %c0_33], %34 {strides = array<i32>} : memref<2x32xf32, #tpu.memory_space<vmem>>, vector<2x32xf32>,
      %cst_34 = arith.constant 0.000000e+00 : f32
      %36 = vector.broadcast %cst_34 : f32 to vector<4x32xf32>
      %c0_35 = arith.constant 0 : index
      %c0_36 = arith.constant 0 : index
      %37 = vector.load %arg10[%c0_35, %c0_36] : memref<4x32xf32, #tpu.memory_space<vmem>>, vector<4x32xf32>
      tpu.vector_store %arg10[%c0_35, %c0_36], %36 {strides = array<i32>} : memref<4x32xf32, #tpu.memory_space<vmem>>, vector<4x32xf32>,
      %cst_37 = arith.constant 0.000000e+00 : f32
      %38 = vector.broadcast %cst_37 : f32 to vector<2x1xf32>
      %c0_38 = arith.constant 0 : index
      %c0_39 = arith.constant 0 : index
      %39 = vector.load %arg11[%c0_38, %c0_39] : memref<2x1xf32, #tpu.memory_space<vmem>>, vector<2x1xf32>
      tpu.vector_store %arg11[%c0_38, %c0_39], %38 {strides = array<i32>} : memref<2x1xf32, #tpu.memory_space<vmem>>, vector<2x1xf32>,
      %cst_40 = arith.constant 0.000000e+00 : f32
      %40 = vector.broadcast %cst_40 : f32 to vector<4x1xf32>
      %c0_41 = arith.constant 0 : index
      %c0_42 = arith.constant 0 : index
      %41 = vector.load %arg12[%c0_41, %c0_42] : memref<4x1xf32, #tpu.memory_space<vmem>>, vector<4x1xf32>
      tpu.vector_store %arg12[%c0_41, %c0_42], %40 {strides = array<i32>} : memref<4x1xf32, #tpu.memory_space<vmem>>, vector<4x1xf32>,
    } else {
    }
    %c0 = arith.constant 0 : index
    %c0_1 = arith.constant 0 : index
    %3 = vector.load %arg3[%c0, %c0_1] : memref<2x8xf32, #tpu.memory_space<vmem>>, vector<2x8xf32>
    %c0_2 = arith.constant 0 : index
    %c0_3 = arith.constant 0 : index
    %4 = vector.load %arg4[%c0_2, %c0_3] : memref<4x8xf32, #tpu.memory_space<vmem>>, vector<4x8xf32>
    %c0_4 = arith.constant 0 : index
    %c0_5 = arith.constant 0 : index
    %5 = vector.load %arg9[%c0_4, %c0_5] : memref<2x32xf32, #tpu.memory_space<vmem>>, vector<2x32xf32>
    %c0_6 = arith.constant 0 : index
    %c0_7 = arith.constant 0 : index
    %c0_8 = arith.constant 0 : index
    %6 = vector.load %arg1[%c0_6, %c0_7, %c0_8] : memref<2x8x32xf32, #tpu.memory_space<vmem>>, vector<2x8x32xf32>
    %7 = vector.shape_cast %3 : vector<2x8xf32> to vector<2x8x1xf32>
    %8 = vector.broadcast %7 : vector<2x8x1xf32> to vector<2x8x32xf32>
    %9 = arith.mulf %6, %8 : vector<2x8x32xf32>
    %cst = arith.constant dense<0.000000e+00> : vector<2x32xf32>
    %10 = vector.multi_reduction <add>, %9, %cst [1] : vector<2x8x32xf32> to vector<2x32xf32>
    %11 = arith.addf %5, %10 : vector<2x32xf32>
    %c0_9 = arith.constant 0 : index
    %c0_10 = arith.constant 0 : index
    %12 = vector.load %arg9[%c0_9, %c0_10] : memref<2x32xf32, #tpu.memory_space<vmem>>, vector<2x32xf32>
    tpu.vector_store %arg9[%c0_9, %c0_10], %11 {strides = array<i32>} : memref<2x32xf32, #tpu.memory_space<vmem>>, vector<2x32xf32>,
    %c0_11 = arith.constant 0 : index
    %c0_12 = arith.constant 0 : index
    %13 = vector.load %arg10[%c0_11, %c0_12] : memref<4x32xf32, #tpu.memory_space<vmem>>, vector<4x32xf32>
    %c0_13 = arith.constant 0 : index
    %c0_14 = arith.constant 0 : index
    %c0_15 = arith.constant 0 : index
    %14 = vector.load %arg2[%c0_13, %c0_14, %c0_15] : memref<4x8x32xf32, #tpu.memory_space<vmem>>, vector<4x8x32xf32>
    %15 = vector.shape_cast %4 : vector<4x8xf32> to vector<4x8x1xf32>
    %16 = vector.broadcast %15 : vector<4x8x1xf32> to vector<4x8x32xf32>
    %17 = arith.mulf %14, %16 : vector<4x8x32xf32>
    %cst_16 = arith.constant dense<0.000000e+00> : vector<4x32xf32>
    %18 = vector.multi_reduction <add>, %17, %cst_16 [1] : vector<4x8x32xf32> to vector<4x32xf32>
    %19 = arith.addf %13, %18 : vector<4x32xf32>
    %c0_17 = arith.constant 0 : index
    %c0_18 = arith.constant 0 : index
    %20 = vector.load %arg10[%c0_17, %c0_18] : memref<4x32xf32, #tpu.memory_space<vmem>>, vector<4x32xf32>
    tpu.vector_store %arg10[%c0_17, %c0_18], %19 {strides = array<i32>} : memref<4x32xf32, #tpu.memory_space<vmem>>, vector<4x32xf32>,
    %c0_19 = arith.constant 0 : index
    %c0_20 = arith.constant 0 : index
    %21 = vector.load %arg11[%c0_19, %c0_20] : memref<2x1xf32, #tpu.memory_space<vmem>>, vector<2x1xf32>
    %cst_21 = arith.constant dense<0.000000e+00> : vector<2xf32>
    %22 = vector.multi_reduction <add>, %3, %cst_21 [1] : vector<2x8xf32> to vector<2xf32>
    %23 = vector.shape_cast %22 : vector<2xf32> to vector<2x1xf32>
    %24 = arith.addf %21, %23 : vector<2x1xf32>
    %c0_22 = arith.constant 0 : index
    %c0_23 = arith.constant 0 : index
    %25 = vector.load %arg11[%c0_22, %c0_23] : memref<2x1xf32, #tpu.memory_space<vmem>>, vector<2x1xf32>
    tpu.vector_store %arg11[%c0_22, %c0_23], %24 {strides = array<i32>} : memref<2x1xf32, #tpu.memory_space<vmem>>, vector<2x1xf32>,
    %c0_24 = arith.constant 0 : index
    %c0_25 = arith.constant 0 : index
    %26 = vector.load %arg12[%c0_24, %c0_25] : memref<4x1xf32, #tpu.memory_space<vmem>>, vector<4x1xf32>
    %cst_26 = arith.constant dense<0.000000e+00> : vector<4xf32>
    %27 = vector.multi_reduction <add>, %4, %cst_26 [1] : vector<4x8xf32> to vector<4xf32>
    %28 = vector.shape_cast %27 : vector<4xf32> to vector<4x1xf32>
    %29 = arith.addf %26, %28 : vector<4x1xf32>
    %c0_27 = arith.constant 0 : index
    %c0_28 = arith.constant 0 : index
    %30 = vector.load %arg12[%c0_27, %c0_28] : memref<4x1xf32, #tpu.memory_space<vmem>>, vector<4x1xf32>
    tpu.vector_store %arg12[%c0_27, %c0_28], %29 {strides = array<i32>} : memref<4x1xf32, #tpu.memory_space<vmem>>, vector<4x1xf32>,
    %c0_i32_29 = arith.constant 0 : i32
    %31 = arith.cmpi eq, %arg0, %c0_i32_29 : i32
    %32 = arith.extui %31 : i1 to i32
    %c0_i32_30 = arith.constant 0 : i32
    %33 = arith.cmpi ne, %32, %c0_i32_30 : i32
    scf.if %33 {
      %c0_31 = arith.constant 0 : index
      %c0_32 = arith.constant 0 : index
      %34 = vector.load %arg9[%c0_31, %c0_32] : memref<2x32xf32, #tpu.memory_space<vmem>>, vector<2x32xf32>
      %c0_33 = arith.constant 0 : index
      %c0_34 = arith.constant 0 : index
      %35 = vector.load %arg11[%c0_33, %c0_34] : memref<2x1xf32, #tpu.memory_space<vmem>>, vector<2x1xf32>
      %cst_35 = arith.constant 9.99999971E-10 : f32
      %36 = vector.broadcast %cst_35 : f32 to vector<2x1xf32>
      %37 = arith.maximumf %35, %36 : vector<2x1xf32>
      %38 = tpu.reciprocal %37 : vector<2x1xf32> -> vector<2x1xf32>
      %39 = vector.broadcast %38 : vector<2x1xf32> to vector<2x32xf32>
      %40 = arith.mulf %34, %39 : vector<2x32xf32>
      %c0_36 = arith.constant 0 : index
      %c0_37 = arith.constant 0 : index
      %41 = vector.load %arg10[%c0_36, %c0_37] : memref<4x32xf32, #tpu.memory_space<vmem>>, vector<4x32xf32>
      %c0_38 = arith.constant 0 : index
      %c0_39 = arith.constant 0 : index
      %42 = vector.load %arg12[%c0_38, %c0_39] : memref<4x1xf32, #tpu.memory_space<vmem>>, vector<4x1xf32>
      %cst_40 = arith.constant 9.99999971E-10 : f32
      %43 = vector.broadcast %cst_40 : f32 to vector<4x1xf32>
      %44 = arith.maximumf %42, %43 : vector<4x1xf32>
      %45 = tpu.reciprocal %44 : vector<4x1xf32> -> vector<4x1xf32>
      %46 = vector.broadcast %45 : vector<4x1xf32> to vector<4x32xf32>
      %47 = arith.mulf %41, %46 : vector<4x32xf32>
      %48 = arith.mulf %40, %40 : vector<2x32xf32>
      %cst_41 = arith.constant dense<0.000000e+00> : vector<2xf32>
      %49 = vector.multi_reduction <add>, %48, %cst_41 [1] : vector<2x32xf32> to vector<2xf32>
      %50 = vector.shape_cast %49 : vector<2xf32> to vector<2x1xf32>
      %cst_42 = arith.constant 1.000000e-24 : f32
      %51 = vector.broadcast %cst_42 : f32 to vector<2x1xf32>
      %52 = arith.maximumf %50, %51 : vector<2x1xf32>
      %53 = math.rsqrt %52 : vector<2x1xf32>
      %54 = vector.broadcast %53 : vector<2x1xf32> to vector<2x32xf32>
      %55 = arith.mulf %40, %54 : vector<2x32xf32>
      %56 = arith.mulf %47, %47 : vector<4x32xf32>
      %cst_43 = arith.constant dense<0.000000e+00> : vector<4xf32>
      %57 = vector.multi_reduction <add>, %56, %cst_43 [1] : vector<4x32xf32> to vector<4xf32>
      %58 = vector.shape_cast %57 : vector<4xf32> to vector<4x1xf32>
      %cst_44 = arith.constant 1.000000e-24 : f32
      %59 = vector.broadcast %cst_44 : f32 to vector<4x1xf32>
      %60 = arith.maximumf %58, %59 : vector<4x1xf32>
      %61 = math.rsqrt %60 : vector<4x1xf32>
      %62 = vector.broadcast %61 : vector<4x1xf32> to vector<4x32xf32>
      %63 = arith.mulf %47, %62 : vector<4x32xf32>
      %cst_45 = arith.constant dense<0.000000e+00> : vector<2x4xf32>
      %64 = tpu.matmul %55, %63, %cst_45 {dimension_numbers = #tpu.dot_dimension_numbers<[1], [1], [0], [0], [0, 0, 1, 0], [], []>} : vector<2x32xf32>, vector<4x32xf32>, vector<2x4xf32> -> vector<2x4xf32>
      %c0_46 = arith.constant 0 : index
      %c0_47 = arith.constant 0 : index
      %65 = vector.load %arg5[%c0_46, %c0_47] : memref<2x4xf32, #tpu.memory_space<vmem>>, vector<2x4xf32>
      tpu.vector_store %arg5[%c0_46, %c0_47], %64 {strides = array<i32>} : memref<2x4xf32, #tpu.memory_space<vmem>>, vector<2x4xf32>,
      %66 = tpu.iota {dimensions = array<i32: 0>} : vector<2x4xi32>
      %67 = tpu.iota {dimensions = array<i32: 1>} : vector<2x4xi32>
      %68 = arith.cmpi eq, %67, %66 : vector<2x4xi32>
      %cst_48 = arith.constant 0.000000e+00 : f32
      %69 = vector.broadcast %cst_48 : f32 to vector<2x4xf32>
      %70 = arith.select %68, %64, %69 : vector<2x4xi1>, vector<2x4xf32>
      %cst_49 = arith.constant dense<0.000000e+00> : vector<2xf32>
      %71 = vector.multi_reduction <add>, %70, %cst_49 [1] : vector<2x4xf32> to vector<2xf32>
      %72 = vector.shape_cast %71 : vector<2xf32> to vector<2x1xf32>
      %c2_i32 = arith.constant 2 : i32
      %73 = vector.broadcast %c2_i32 : i32 to vector<2x4xi32>
      %74 = arith.addi %66, %73 : vector<2x4xi32>
      %75 = arith.cmpi eq, %67, %74 : vector<2x4xi32>
      %cst_50 = arith.constant 0.000000e+00 : f32
      %76 = vector.broadcast %cst_50 : f32 to vector<2x4xf32>
      %77 = arith.select %75, %64, %76 : vector<2x4xi1>, vector<2x4xf32>
      %cst_51 = arith.constant dense<0.000000e+00> : vector<2xf32>
      %78 = vector.multi_reduction <add>, %77, %cst_51 [1] : vector<2x4xf32> to vector<2xf32>
      %79 = vector.shape_cast %78 : vector<2xf32> to vector<2x1xf32>
      %c0_52 = arith.constant 0 : index
      %c0_53 = arith.constant 0 : index
      %80 = vector.load %arg6[%c0_52, %c0_53] : memref<2x1xf32, #tpu.memory_space<vmem>>, vector<2x1xf32>
      tpu.vector_store %arg6[%c0_52, %c0_53], %72 {strides = array<i32>} : memref<2x1xf32, #tpu.memory_space<vmem>>, vector<2x1xf32>,
      %c0_54 = arith.constant 0 : index
      %c0_55 = arith.constant 0 : index
      %81 = vector.load %arg7[%c0_54, %c0_55] : memref<2x1xf32, #tpu.memory_space<vmem>>, vector<2x1xf32>
      tpu.vector_store %arg7[%c0_54, %c0_55], %79 {strides = array<i32>} : memref<2x1xf32, #tpu.memory_space<vmem>>, vector<2x1xf32>,
      %cst_56 = arith.constant 14.2857141 : f32
      %82 = vector.broadcast %cst_56 : f32 to vector<2x4xf32>
      %83 = arith.mulf %64, %82 : vector<2x4xf32>
      %cst_57 = arith.constant dense<0xFF800000> : vector<2xf32>
      %84 = vector.multi_reduction <maximumf>, %83, %cst_57 [1] : vector<2x4xf32> to vector<2xf32>
      %85 = vector.shape_cast %84 : vector<2xf32> to vector<2x1xf32>
      %86 = vector.broadcast %85 : vector<2x1xf32> to vector<2x4xf32>
      %87 = arith.subf %83, %86 : vector<2x4xf32>
      %88 = math.exp %87 : vector<2x4xf32>
      %cst_58 = arith.constant dense<0.000000e+00> : vector<2xf32>
      %89 = vector.multi_reduction <add>, %88, %cst_58 [1] : vector<2x4xf32> to vector<2xf32>
      %90 = vector.shape_cast %89 : vector<2xf32> to vector<2x1xf32>
      %91 = math.log %90 : vector<2x1xf32>
      %92 = arith.addf %85, %91 : vector<2x1xf32>
      %cst_59 = arith.constant 14.2857141 : f32
      %93 = vector.broadcast %cst_59 : f32 to vector<2x1xf32>
      %94 = arith.mulf %72, %93 : vector<2x1xf32>
      %95 = arith.subf %92, %94 : vector<2x1xf32>
      %cst_60 = arith.constant dense<0.000000e+00> : vector<1xf32>
      %96 = vector.multi_reduction <add>, %95, %cst_60 [0] : vector<2x1xf32> to vector<1xf32>
      %97 = vector.shape_cast %96 : vector<1xf32> to vector<1x1xf32>
      %cst_61 = arith.constant 5.000000e-01 : f32
      %98 = vector.broadcast %cst_61 : f32 to vector<1x1xf32>
      %99 = arith.mulf %97, %98 : vector<1x1xf32>
      %c0_62 = arith.constant 0 : index
      %c0_63 = arith.constant 0 : index
      %100 = vector.load %arg8[%c0_62, %c0_63] : memref<1x1xf32, #tpu.memory_space<vmem>>, vector<1x1xf32>
      tpu.vector_store %arg8[%c0_62, %c0_63], %99 {strides = array<i32>} : memref<1x1xf32, #tpu.memory_space<vmem>>, vector<1x1xf32>,
    } else {
    }
    return
  }
  func.func @transform_0(%arg0: i32) -> (i32, i32, i32) {
    %c0_i32 = arith.constant 0 : i32
    %c0_i32_0 = arith.constant 0 : i32
    %c0_i32_1 = arith.constant 0 : i32
    return %c0_i32, %arg0, %c0_i32_0 : i32, i32, i32
  }
  func.func @transform_1(%arg0: i32) -> (i32, i32, i32) {
    %c0_i32 = arith.constant 0 : i32
    %c0_i32_0 = arith.constant 0 : i32
    %c0_i32_1 = arith.constant 0 : i32
    return %c0_i32, %arg0, %c0_i32_0 : i32, i32, i32
  }
  func.func @transform_2(%arg0: i32) -> (i32, i32) {
    %c0_i32 = arith.constant 0 : i32
    %c0_i32_0 = arith.constant 0 : i32
    return %c0_i32, %arg0 : i32, i32
  }
  func.func @transform_3(%arg0: i32) -> (i32, i32) {
    %c0_i32 = arith.constant 0 : i32
    %c0_i32_0 = arith.constant 0 : i32
    return %c0_i32, %arg0 : i32, i32
  }
  func.func @transform_4(%arg0: i32) -> (i32, i32) {
    %c0_i32 = arith.constant 0 : i32
    %c0_i32_0 = arith.constant 0 : i32
    %c0_i32_1 = arith.constant 0 : i32
    return %c0_i32, %c0_i32_0 : i32, i32
  }
  func.func @transform_5(%arg0: i32) -> (i32, i32) {
    %c0_i32 = arith.constant 0 : i32
    %c0_i32_0 = arith.constant 0 : i32
    %c0_i32_1 = arith.constant 0 : i32
    return %c0_i32, %c0_i32_0 : i32, i32
  }
  func.func @transform_6(%arg0: i32) -> (i32, i32) {
    %c0_i32 = arith.constant 0 : i32
    %c0_i32_0 = arith.constant 0 : i32
    %c0_i32_1 = arith.constant 0 : i32
    return %c0_i32, %c0_i32_0 : i32, i32
  }
  func.func @transform_7(%arg0: i32) -> (i32, i32) {
    %c0_i32 = arith.constant 0 : i32
    %c0_i32_0 = arith.constant 0 : i32
    %c0_i32_1 = arith.constant 0 : i32
    return %c0_i32, %c0_i32_0 : i32, i32
  }
}

</mosaic_0001>

<llo_original>
// kernel: info_nce_loss.1
$region0: #{info_nce_loss.1}
  #allocation0 [shape = 'u32[]', space=smem, size = 0x4, offset = 0x4, fixed_abs, tag = 'smem constant byte address 0x4 - core index']
  #allocation1 [shape = 'u32[144,128]{1,0:T(1,128)}', space=vmem, size = 0x12000, scoped, tag = 'internal scratch']
  #allocation2 [shape = 'f32[2,32]{1,0:T(2,128)}', space=vmem, size = 0x400, scoped, tag = 'scratch operand']
  #allocation3 [shape = 'f32[4,32]{1,0:T(4,128)}', space=vmem, size = 0x800, scoped, tag = 'scratch operand']
  #allocation4 [shape = 'f32[2,1]{1,0:T(2,128)}', space=vmem, size = 0x400, scoped, tag = 'scratch operand']
  #allocation5 [shape = 'f32[4,1]{1,0:T(4,128)}', space=vmem, size = 0x800, scoped, tag = 'scratch operand']
  %s0 = inlined_call_operand.hbm [shape: f32[2,8,32], index: 0, kind: input, shape index: {}]
  %s1 = inlined_call_operand.hbm [shape: f32[4,8,32], index: 1, kind: input, shape index: {}]
  %s2 = inlined_call_operand.vmem [shape: f32[2,8], index: 2, kind: input, shape index: {}]
  %s3 = inlined_call_operand.vmem [shape: f32[4,8], index: 3, kind: input, shape index: {}]
  %s4 = inlined_call_operand.hbm [shape: f32[2,4], index: 4, kind: output, shape index: {0}]
  %s5 = inlined_call_operand.vmem [shape: f32[2,1], index: 5, kind: output, shape index: {1}]
  %s6 = inlined_call_operand.vmem [shape: f32[2,1], index: 6, kind: output, shape index: {2}]
  %s7 = inlined_call_operand.hbm [shape: f32[1,1], index: 7, kind: output, shape index: {3}]
  %8 = xla_tuple %s4, %s5, %s6, %s7
  %s9 = sld [smem:[#allocation0]]
  $region66: #{info_nce_loss.1} parent=0
    _
  %s11 = ssub.s32 1, %s9
  %s12 = scalar_select 0, %s11, %s9
  $region1: #{info_nce_loss.1} parent=0
    #allocation6 [shape = 'u8[8192]{0}', space=vmem, size = 0x2000, scoped, tag = 'input window, operand 0, single buffered']
    #allocation7 [shape = 's32[1]{0}', space=sflag, size = 0x4, scoped, tag = 'scoped memory for info_nce_loss.1']
    #allocation8 [shape = 's32[1]{0}', space=sflag, size = 0x4, scoped, tag = 'scoped memory for info_nce_loss.1']
    #allocation9 [shape = 'u8[16384]{0}', space=vmem, size = 0x4000, scoped, tag = 'input window, operand 1, single buffered']
    #allocation10 [shape = 's32[1]{0}', space=sflag, size = 0x4, scoped, tag = 'scoped memory for info_nce_loss.1']
    #allocation11 [shape = 'u8[1024]{0}', space=vmem, size = 0x400, scoped, tag = 'output window, operand 0, single buffered']
    #allocation12 [shape = 'u8[512]{0}', space=vmem, size = 0x400, scoped, tag = 'output window, operand 3, single buffered']
    #allocation13 [shape = 's32[1]{0}', space=sflag, size = 0x4, scoped, tag = 'scoped memory for info_nce_loss.1']
    %13 = vsyncpa [#allocation7], 0
    %14 = vsyncpa [#allocation10], 0
    %15 = vsyncpa [#allocation8], 0
    %16 = vsyncpa [#allocation13], 0
    // Predicated region
    $region2: #{info_nce_loss.1} parent=1 // pred_check
      _
    $region3: #{info_nce_loss.1} parent=1 // pred_check_branch
      %18 = sbr.rel (0) target = $region5
    $region4: #{info_nce_loss.1} parent=1 // pred_region
      %s20 = ssub.s32 256, 256
      %21 = vsyncadd [#allocation7], %s20
      %s22 = sshll.u32 [#allocation6], 4
      %s23 = int_to_ptr.vmem [resolvable:$true] %s22
      %28 = dma.hbm_to_vmem [thread:$0]  %s0, 256, %s23, [#allocation7], 128, 128, 8
    $region5: #{info_nce_loss.1} parent=1 // pred_fallthru
      _
    // Predicated region
    $region6: #{info_nce_loss.1} parent=1 // pred_check
      _
    $region7: #{info_nce_loss.1} parent=1 // pred_check_branch
      %30 = sbr.rel (0) target = $region9
    $region8: #{info_nce_loss.1} parent=1 // pred_region
      %s32 = ssub.s32 512, 512
      %33 = vsyncadd [#allocation10], %s32
      %s34 = sshll.u32 [#allocation9], 4
      %s35 = int_to_ptr.vmem [resolvable:$true] %s34
      %40 = dma.hbm_to_vmem [thread:$0]  %s1, 512, %s35, [#allocation10], 128, 128, 8
    $region9: #{info_nce_loss.1} parent=1 // pred_fallthru
      _
    // Predicated region
    $region10: #{info_nce_loss.1} parent=1 // pred_check
      _
    $region11: #{info_nce_loss.1} parent=1 // pred_check_branch
      %42 = sbr.rel (0) target = $region13
    $region12: #{info_nce_loss.1} parent=1 // pred_region
      _
    $region13: #{info_nce_loss.1} parent=1 // pred_fallthru
      _
    // Predicated region
    $region14: #{info_nce_loss.1} parent=1 // pred_check
      _
    $region15: #{info_nce_loss.1} parent=1 // pred_check_branch
      %44 = sbr.rel (0) target = $region17
    $region16: #{info_nce_loss.1} parent=1 // pred_region
      _
    $region17: #{info_nce_loss.1} parent=1 // pred_fallthru
      _
    // Predicated region
    $region18: #{info_nce_loss.1} parent=1 // pred_check
      _
    $region19: #{info_nce_loss.1} parent=1 // pred_check_branch
      %46 = sbr.rel (0) target = $region21
    $region20: #{info_nce_loss.1} parent=1 // pred_region
      %47 = dma.done [#allocation7], 256
    $region21: #{info_nce_loss.1} parent=1 // pred_fallthru
      _
    // Predicated region
    $region22: #{info_nce_loss.1} parent=1 // pred_check
      _
    $region23: #{info_nce_loss.1} parent=1 // pred_check_branch
      %49 = sbr.rel (0) target = $region25
    $region24: #{info_nce_loss.1} parent=1 // pred_region
      %50 = dma.done [#allocation10], 512
    $region25: #{info_nce_loss.1} parent=1 // pred_fallthru
      _
    %p51 = scmp.eq.s32.totalorder 0, 0
    // Predicated region
    $region26: #{info_nce_loss.1} parent=1 // pred_check
      %p52 = pneg %p51
    $region27: #{info_nce_loss.1} parent=1 // pred_check_branch
      %54 = sbr.rel (%p52) target = $region29
    $region28: #{info_nce_loss.1} parent=1 // pred_region
      %vm55 = vcmask 254976
      %56 = vst.msk [vmem:[#allocation2] sm:$0x3] %vm55, 0.0
      %vm57 = vcmask 257024
      %58 = vst.msk [vmem:[#allocation3] sm:$0xf] %vm57, 0.0
      %vm59 = vcmask 1024
      %60 = vst.msk [vmem:[#allocation4] sm:$0x3] %vm59, 0.0
      %vm61 = vcmask 3072
      %62 = vst.msk [vmem:[#allocation5] sm:$0xf] %vm61, 0.0
    $region29: #{info_nce_loss.1} parent=1 // pred_fallthru
      _
    %v63 = vld [vmem:[%s2] sm:$0x3]
    %v64 = vld [vmem:[%s3] sm:$0xf]
    %v65 = vld [vmem:[#allocation2] sm:$0x3]
    %v66 = vld [vmem:[#allocation6] sm:$0xff]
    %v67 = vld [vmem:[#allocation6 + $0x8] sm:$0xff]
    %v68 = vlaneseq
    %v69 = vshrl.u32 %v68, 7
    %v70 = vsub.s32 0, %v69
    %v71 = vrot.slane %v63, %v70
    %73 = vbcast.lane.b32.xlu0 %v71, 256
    %v74 = vpop.permute.xlu0 %73
    %v75 = vlaneseq
    %v76 = vshrl.u32 %v75, 7
    %v77 = vsub.s32 1, %v76
    %v78 = vrot.slane %v63, %v77
    %80 = vbcast.lane.b32.xlu0 %v78, 256
    %v81 = vpop.permute.xlu0 %80
    %v82 = vmul.f32 %v66, %v74
    %v83 = vmul.f32 %v67, %v81
    %vm84 = vcmask 261120
    %v85 = vsel %vm84, %v82, 0.0
    %v86 = vrot.slane %v85, 4
    %v87 = vadd.f32 %v85, %v86
    %v88 = vrot.slane %v87, 2
    %v89 = vadd.f32 %v87, %v88
    %v90 = vrot.slane %v89, 1
    %v91 = vadd.f32 %v89, %v90
    %v92 = vsel %vm84, %v83, 0.0
    %v93 = vrot.slane %v92, 4
    %v94 = vadd.f32 %v92, %v93
    %v95 = vrot.slane %v94, 2
    %v96 = vadd.f32 %v94, %v95
    %v97 = vrot.slane %v96, 1
    %v98 = vadd.f32 %v96, %v97
    %vm101 = vcmask 1041409
    %v102 = vsel %vm101, %v98, %v91
    %v104 = vadd.f32 %v65, %v102
    %vm105 = vcmask 254976
    %106 = vst.msk [vmem:[#allocation2] sm:$0x3] %vm105, %v104
    %v107 = vld [vmem:[#allocation3] sm:$0xf]
    %v108 = vld [vmem:[#allocation9] sm:$0xff]
    %v109 = vld [vmem:[#allocation9 + $0x8] sm:$0xff]
    %v110 = vld [vmem:[#allocation9 + $0x10] sm:$0xff]
    %v111 = vld [vmem:[#allocation9 + $0x18] sm:$0xff]
    %v112 = vlaneseq
    %v113 = vshrl.u32 %v112, 7
    %v114 = vsub.s32 0, %v113
    %v115 = vrot.slane %v64, %v114
    %117 = vbcast.lane.b32.xlu0 %v115, 256
    %v118 = vpop.permute.xlu0 %117
    %v119 = vlaneseq
    %v120 = vshrl.u32 %v119, 7
    %v121 = vsub.s32 1, %v120
    %v122 = vrot.slane %v64, %v121
    %124 = vbcast.lane.b32.xlu0 %v122, 256
    %v125 = vpop.permute.xlu0 %124
    %v126 = vlaneseq
    %v127 = vshrl.u32 %v126, 7
    %v128 = vsub.s32 2, %v127
    %v129 = vrot.slane %v64, %v128
    %131 = vbcast.lane.b32.xlu0 %v129, 256
    %v132 = vpop.permute.xlu0 %131
    %v133 = vlaneseq
    %v134 = vshrl.u32 %v133, 7
    %v135 = vsub.s32 3, %v134
    %v136 = vrot.slane %v64, %v135
    %138 = vbcast.lane.b32.xlu0 %v136, 256
    %v139 = vpop.permute.xlu0 %138
    %v140 = vmul.f32 %v108, %v118
    %v141 = vmul.f32 %v109, %v125
    %v142 = vmul.f32 %v110, %v132
    %v143 = vmul.f32 %v111, %v139
    %v144 = vsel %vm84, %v140, 0.0
    %v145 = vrot.slane %v144, 4
    %v146 = vadd.f32 %v144, %v145
    %v147 = vrot.slane %v146, 2
    %v148 = vadd.f32 %v146, %v147
    %v149 = vrot.slane %v148, 1
    %v150 = vadd.f32 %v148, %v149
    %v151 = vsel %vm84, %v141, 0.0
    %v152 = vrot.slane %v151, 4
    %v153 = vadd.f32 %v151, %v152
    %v154 = vrot.slane %v153, 2
    %v155 = vadd.f32 %v153, %v154
    %v156 = vrot.slane %v155, 1
    %v157 = vadd.f32 %v155, %v156
    %v158 = vsel %vm84, %v142, 0.0
    %v159 = vrot.slane %v158, 4
    %v160 = vadd.f32 %v158, %v159
    %v161 = vrot.slane %v160, 2
    %v162 = vadd.f32 %v160, %v161
    %v163 = vrot.slane %v162, 1
    %v164 = vadd.f32 %v162, %v163
    %v165 = vsel %vm84, %v143, 0.0
    %v166 = vrot.slane %v165, 4
    %v167 = vadd.f32 %v165, %v166
    %v168 = vrot.slane %v167, 2
    %v169 = vadd.f32 %v167, %v168
    %v170 = vrot.slane %v169, 1
    %v171 = vadd.f32 %v169, %v170
    %v176 = vsel %vm101, %v157, %v150
    %vm177 = vcmask 1042434
    %v178 = vsel %vm177, %v164, %v176
    %vm179 = vcmask 1043459
    %v180 = vsel %vm179, %v171, %v178
    %v182 = vadd.f32 %v107, %v180
    %vm183 = vcmask 257024
    %184 = vst.msk [vmem:[#allocation3] sm:$0xf] %vm183, %v182
    %v185 = vld [vmem:[#allocation4] sm:$0x3]
    %vm186 = vcmask 58368
    %v187 = vsel %vm186, %v63, 0.0
    %188 = vadd.xlane.f32.xlu0 %v187
    %v189 = vpop.xlane.xlu0 %188
    %v190 = vadd.f32 %v185, %v189
    %vm191 = vcmask 1024
    %192 = vst.msk [vmem:[#allocation4] sm:$0x3] %vm191, %v190
    %v193 = vld [vmem:[#allocation5] sm:$0xf]
    %vm194 = vcmask 60416
    %v195 = vsel %vm194, %v64, 0.0
    %196 = vadd.xlane.f32.xlu0 %v195
    %v197 = vpop.xlane.xlu0 %196
    %v198 = vadd.f32 %v193, %v197
    %vm199 = vcmask 3072
    %200 = vst.msk [vmem:[#allocation5] sm:$0xf] %vm199, %v198
    // Predicated region
    $region30: #{info_nce_loss.1} parent=1 // pred_check
      %p201 = pneg %p51
    $region31: #{info_nce_loss.1} parent=1 // pred_check_branch
      %203 = sbr.rel (%p201) target = $region33
    $region32: #{info_nce_loss.1} parent=1 // pred_region
      %v204 = vld [vmem:[#allocation2] sm:$0x3]
      %v205 = vld [vmem:[#allocation4] sm:$0x3]
      %v206 = vmax.f32 %v205, 1e-09
      %v207 = vrcp.pop %v206
      %209 = vset.pattern.permute.xlu0 0
      %210 = vperm.xlu0 %209, %v207
      %v211 = vpop.permute.xlu0 %210
      %v213 = vmul.f32 %v204, %v211
      %v214 = vld [vmem:[#allocation3] sm:$0xf]
      %v215 = vld [vmem:[#allocation5] sm:$0xf]
      %v216 = vmax.f32 %v215, 1e-09
      %v217 = vrcp.pop %v216
      %219 = vset.pattern.permute.xlu0 0
      %220 = vperm.xlu0 %219, %v217
      %v221 = vpop.permute.xlu0 %220
      %v223 = vmul.f32 %v214, %v221
      %v224 = vmul.f32 %v213, %v213
      %v225 = vsel %vm105, %v224, 0.0
      %226 = vadd.xlane.f32.xlu0 %v225
      %v227 = vpop.xlane.xlu0 %226
      %v228 = vmax.f32 %v227, 1e-24
      %v229 = vrsqrt.pop %v228
      %v230 = vmul.f32 %v213, %v229
      %v231 = vmul.f32 %v223, %v223
      %v232 = vsel %vm183, %v231, 0.0
      %233 = vadd.xlane.f32.xlu0 %v232
      %v234 = vpop.xlane.xlu0 %233
      %v235 = vmax.f32 %v234, 1e-24
      %v236 = vrsqrt.pop %v235
      %v237 = vmul.f32 %v223, %v236
      %v239 = vsel %vm84, %v230, 0
      %v242 = vsel %vm84, %v237, 0
      %244 = vmatprep.subr.mxu0 0.0
      %245 = vmatpush1.xpose.msra.mxu0 0.0
      %246 = vmatprep.subr.mxu0 0.0
      %247 = vmatpush1.xpose.msra.mxu0 0.0
      %248 = vmatprep.subr.mxu0 0.0
      %249 = vmatpush1.xpose.msra.mxu0 0.0
      %250 = vmatprep.subr.mxu0 0.0
      %251 = vmatpush1.xpose.msra.mxu0 0.0
      %252 = vmatprep.subr.mxu0 0.0
      %253 = vmatpush1.xpose.msra.mxu0 0.0
      %254 = vmatprep.subr.mxu0 0.0
      %255 = vmatpush1.xpose.msra.mxu0 0.0
      %256 = vmatprep.subr.mxu0 0.0
      %257 = vmatpush1.xpose.msra.mxu0 0.0
      %258 = vmatprep.subr.mxu0 0.0
      %259 = vmatpush1.xpose.msra.mxu0 0.0
      %260 = vmatprep.subr.mxu0 0.0
      %261 = vmatpush1.xpose.msra.mxu0 0.0
      %262 = vmatprep.subr.mxu0 0.0
      %263 = vmatpush1.xpose.msra.mxu0 0.0
      %264 = vmatprep.subr.mxu0 0.0
      %265 = vmatpush1.xpose.msra.mxu0 0.0
      %266 = vmatprep.subr.mxu0 0.0
      %267 = vmatpush1.xpose.msra.mxu0 0.0
      %268 = vmatprep.subr.mxu0 0.0
      %269 = vmatpush1.xpose.msra.mxu0 0.0
      %270 = vmatprep.subr.mxu0 0.0
      %271 = vmatpush1.xpose.msra.mxu0 0.0
      %272 = vmatprep.subr.mxu0 0.0
      %273 = vmatpush1.xpose.msra.mxu0 0.0
      %274 = vmatprep.subr.mxu0 0.0
      %275 = vmatpush1.xpose.msra.mxu0 %v242
      %276 = vmatprep.subr.mxu0 0.0
      %277 = vmatpush2.xpose.msra.mxu0 0.0
      %278 = vmatprep.subr.mxu0 0.0
      %279 = vmatpush2.xpose.msra.mxu0 0.0
      %280 = vmatprep.subr.mxu0 0.0
      %281 = vmatpush2.xpose.msra.mxu0 0.0
      %282 = vmatprep.subr.mxu0 0.0
      %283 = vmatpush2.xpose.msra.mxu0 0.0
      %284 = vmatprep.subr.mxu0 0.0
      %285 = vmatpush2.xpose.msra.mxu0 0.0
      %286 = vmatprep.subr.mxu0 0.0
      %287 = vmatpush2.xpose.msra.mxu0 0.0
      %288 = vmatprep.subr.mxu0 0.0
      %289 = vmatpush2.xpose.msra.mxu0 0.0
      %290 = vmatprep.subr.mxu0 0.0
      %291 = vmatpush2.xpose.msra.mxu0 0.0
      %292 = vmatprep.subr.mxu0 0.0
      %293 = vmatpush2.xpose.msra.mxu0 0.0
      %294 = vmatprep.subr.mxu0 0.0
      %295 = vmatpush2.xpose.msra.mxu0 0.0
      %296 = vmatprep.subr.mxu0 0.0
      %297 = vmatpush2.xpose.msra.mxu0 0.0
      %298 = vmatprep.subr.mxu0 0.0
      %299 = vmatpush2.xpose.msra.mxu0 0.0
      %300 = vmatprep.subr.mxu0 0.0
      %301 = vmatpush2.xpose.msra.mxu0 0.0
      %302 = vmatprep.subr.mxu0 0.0
      %303 = vmatpush2.xpose.msra.mxu0 0.0
      %304 = vmatprep.subr.mxu0 0.0
      %305 = vmatpush2.xpose.msra.mxu0 0.0
      %306 = vmatprep.subr.mxu0 0.0
      %307 = vmatpush2.xpose.msra.mxu0 0.0
      %308 = vmatprep.mubr.f32.mxu0 0.0
      %309 = vmatmul.mubr.f32.gmra.mxu0 %v239
      %v310 = vpop.f32.mrf.mxu0
      %v311 = vadd.f32 0.0, %v310
      %v312 = vpop.f32.mrf.mxu0
      %313 = vdwg.mxu0
      %vm314 = vcmask 25600
      %315 = vst.msk [vmem:[#allocation11] sm:$0x3] %vm314, %v311
      %v316 = vlaneseq
      %v317 = vshrl.u32 %v316, 7
      %v318 = vlaneseq
      %v319 = vand.u32 %v318, 127
      %vm320 = vcmp.eq.s32.totalorder %v319, %v317
      %v321 = vsel %vm320, %v311, 0.0
      %v322 = vsel %vm314, %v321, 0.0
      %323 = vadd.xlane.f32.xlu0 %v322
      %v324 = vpop.xlane.xlu0 %323
      %v325 = vadd.s32 %v317, 2
      %vm326 = vcmp.eq.s32.totalorder %v319, %v325
      %v327 = vsel %vm326, %v311, 0.0
      %v328 = vsel %vm314, %v327, 0.0
      %329 = vadd.xlane.f32.xlu0 %v328
      %v330 = vpop.xlane.xlu0 %329
      %331 = vst.msk [vmem:[%s5] sm:$0x3] %vm191, %v324
      %332 = vst.msk [vmem:[%s6] sm:$0x3] %vm191, %v330
      %v333 = vmul.f32 %v311, 14.285714
      %v334 = vsel %vm314, %v333, -inf
      %335 = vmax.xlane.f32.xlu0 %v334
      %v336 = vpop.xlane.xlu0 %335
      %v337 = vsub.f32 %v333, %v336
      %v338 = vmul.f32 %v337, 1.442695
      %v339 = vpow.pop %v338
      %v340 = vsel %vm314, %v339, 0.0
      %341 = vadd.xlane.f32.xlu0 %v340
      %v342 = vpop.xlane.xlu0 %341
      %v343 = vlog2.pop %v342
      %v344 = vmul.f32 %v343, 0.6931472
      %v345 = vadd.f32 %v336, %v344
      %v346 = vmul.f32 %v324, 14.285714
      %v347 = vsub.f32 %v345, %v346
      %vm348 = vcmask 1041408
      %v349 = vsel %vm348, %v347, 0.0
      %v350 = vrot.slane %v349, 4
      %v351 = vadd.f32 %v349, %v350
      %v352 = vrot.slane %v351, 2
      %v353 = vadd.f32 %v351, %v352
      %v354 = vrot.slane %v353, 1
      %v355 = vadd.f32 %v353, %v354
      %v356 = vmul.f32 %v355, 0.5
      %vm357 = vcmask 0
      %358 = vst.msk [vmem:[#allocation12] sm:$0x1] %vm357, %v356
    $region33: #{info_nce_loss.1} parent=1 // pred_fallthru
      _
    // Predicated region
    $region34: #{info_nce_loss.1} parent=1 // pred_check
      _
    $region35: #{info_nce_loss.1} parent=1 // pred_check_branch
      %360 = sbr.rel (0) target = $region37
    $region36: #{info_nce_loss.1} parent=1 // pred_region
      %s362 = ssub.s32 32, 32
      %363 = vsyncadd [#allocation8], %s362
      %s365 = sshll.u32 [#allocation11], 4
      %s366 = int_to_ptr.vmem [resolvable:$true] %s365
      %368 = dma.vmem_to_hbm [thread:$0]  %s366, 32, %s4, [#allocation8]
    $region37: #{info_nce_loss.1} parent=1 // pred_fallthru
      _
    // Predicated region
    $region38: #{info_nce_loss.1} parent=1 // pred_check
      _
    $region39: #{info_nce_loss.1} parent=1 // pred_check_branch
      %370 = sbr.rel (0) target = $region41
    $region40: #{info_nce_loss.1} parent=1 // pred_region
      _
    $region41: #{info_nce_loss.1} parent=1 // pred_fallthru
      _
    // Predicated region
    $region42: #{info_nce_loss.1} parent=1 // pred_check
      _
    $region43: #{info_nce_loss.1} parent=1 // pred_check_branch
      %372 = sbr.rel (0) target = $region45
    $region44: #{info_nce_loss.1} parent=1 // pred_region
      _
    $region45: #{info_nce_loss.1} parent=1 // pred_fallthru
      _
    // Predicated region
    $region46: #{info_nce_loss.1} parent=1 // pred_check
      _
    $region47: #{info_nce_loss.1} parent=1 // pred_check_branch
      %374 = sbr.rel (0) target = $region49
    $region48: #{info_nce_loss.1} parent=1 // pred_region
      %s376 = ssub.s32 16, 16
      %377 = vsyncadd [#allocation13], %s376
      %s379 = sshll.u32 [#allocation12], 4
      %s380 = int_to_ptr.vmem [resolvable:$true] %s379
      %382 = dma.vmem_to_hbm [thread:$0]  %s380, 16, %s7, [#allocation13]
    $region49: #{info_nce_loss.1} parent=1 // pred_fallthru
      _
    // Predicated region
    $region50: #{info_nce_loss.1} parent=1 // pred_check
      _
    $region51: #{info_nce_loss.1} parent=1 // pred_check_branch
      %384 = sbr.rel (0) target = $region53
    $region52: #{info_nce_loss.1} parent=1 // pred_region
      %385 = dma.done [#allocation8], 32
    $region53: #{info_nce_loss.1} parent=1 // pred_fallthru
      _
    // Predicated region
    $region54: #{info_nce_loss.1} parent=1 // pred_check
      _
    $region55: #{info_nce_loss.1} parent=1 // pred_check_branch
      %387 = sbr.rel (0) target = $region57
    $region56: #{info_nce_loss.1} parent=1 // pred_region
      _
    $region57: #{info_nce_loss.1} parent=1 // pred_fallthru
      _
    // Predicated region
    $region58: #{info_nce_loss.1} parent=1 // pred_check
      _
    $region59: #{info_nce_loss.1} parent=1 // pred_check_branch
      %389 = sbr.rel (0) target = $region61
    $region60: #{info_nce_loss.1} parent=1 // pred_region
      _
    $region61: #{info_nce_loss.1} parent=1 // pred_fallthru
      _
    // Predicated region
    $region62: #{info_nce_loss.1} parent=1 // pred_check
      _
    $region63: #{info_nce_loss.1} parent=1 // pred_check_branch
      %391 = sbr.rel (0) target = $region65
    $region64: #{info_nce_loss.1} parent=1 // pred_region
      %392 = dma.done [#allocation13], 16
    $region65: #{info_nce_loss.1} parent=1 // pred_fallthru
      _
    %393 = vsyncpa [#allocation7], 1
    %394 = vsyncpa [#allocation10], 1
    %395 = vsyncpa [#allocation8], 1
    %396 = vsyncpa [#allocation13], 1

</llo_original>
